<compile_context>
chip_gen: v6e
topology: v6e:2x2x1
jax: 0.10.0
libtpu: 0.0.40
codegen_flags: <defaults>
</compile_context>

<pallas_src>
import functools

import jax
import jax.numpy as jnp
from jax.experimental import pallas as pl
from jax.experimental.pallas import tpu as pltpu


def _ceil_to(x, m):
    return (x + m - 1) // m * m


# --------------------------------------------------------------------------
# Pallas kernels
# --------------------------------------------------------------------------
def _make_fused_kernel(relu, has_res):
    """bf16 matmul (f32 acc) + BN(scale,bias) [+ residual] [+ ReLU]."""

    def _epilogue(acc_ref, scale_ref, bias_ref, res_ref, o_ref):
        # Epilogue stays in f32; single astype at the final store.
        y = acc_ref[...] * scale_ref[...] + bias_ref[...]
        if has_res:
            y = y + res_ref[...].astype(jnp.float32)
        if relu:
            y = jnp.maximum(y, 0.0)
        o_ref[...] = y.astype(o_ref.dtype)

    if has_res:
        def kernel(a_ref, b_ref, scale_ref, bias_ref, res_ref, o_ref, acc_ref):
            k = pl.program_id(2)

            @pl.when(k == 0)
            def _():
                acc_ref[...] = jnp.zeros_like(acc_ref)

            acc_ref[...] += jnp.dot(a_ref[...], b_ref[...],
                                    preferred_element_type=jnp.float32)

            @pl.when(k == pl.num_programs(2) - 1)
            def _():
                _epilogue(acc_ref, scale_ref, bias_ref, res_ref, o_ref)
    else:
        def kernel(a_ref, b_ref, scale_ref, bias_ref, o_ref, acc_ref):
            k = pl.program_id(2)

            @pl.when(k == 0)
            def _():
                acc_ref[...] = jnp.zeros_like(acc_ref)

            acc_ref[...] += jnp.dot(a_ref[...], b_ref[...],
                                    preferred_element_type=jnp.float32)

            @pl.when(k == pl.num_programs(2) - 1)
            def _():
                _epilogue(acc_ref, scale_ref, bias_ref, None, o_ref)

    return kernel


def _pick_tiles(M, N, K):
    """Tile sizes: bf16-friendly sublanes (16), 128-multiple lanes,
    K tile chosen to divide padded K (no wasted MXU work)."""
    Mp = _ceil_to(max(M, 16), 16)
    tm = Mp if Mp <= 512 else 256
    Mp = _ceil_to(Mp, tm)

    Np = _ceil_to(max(N, 128), 128)
    if Np <= 256:
        tn = Np
    elif Np % 256 == 0:
        tn = 256
    else:
        tn = 128
    Np = _ceil_to(Np, tn)

    Kp = _ceil_to(max(K, 128), 128)
    if Kp <= 1024:
        tk = Kp
    else:
        tk = 128
        for cand in (512, 384, 256):
            if Kp % cand == 0:
                tk = cand
                break
    Kp = _ceil_to(Kp, tk)
    return Mp, Np, Kp, tm, tn, tk


@functools.partial(jax.jit, static_argnames=("relu",))
def fused_matmul_bn(a, w, scale, bias, residual=None, *, relu=True):
    """a: (M,K)  w: (K,N)  scale/bias: (N,)  residual: (M,N) or None.
    Returns bf16 (M,N).  bf16 operands, f32 accumulation."""
    M, K = a.shape
    N = w.shape[1]
    Mp, Np, Kp, tm, tn, tk = _pick_tiles(M, N, K)

    ap = jnp.zeros((Mp, Kp), jnp.bfloat16).at[:M, :K].set(
        a.astype(jnp.bfloat16))
    wp = jnp.zeros((Kp, Np), jnp.bfloat16).at[:K, :N].set(
        w.astype(jnp.bfloat16))
    sp = jnp.zeros((1, Np), jnp.float32).at[0, :N].set(
        scale.astype(jnp.float32))
    bp = jnp.zeros((1, Np), jnp.float32).at[0, :N].set(
        bias.astype(jnp.float32))

    has_res = residual is not None
    in_specs = [
        pl.BlockSpec((tm, tk), lambda i, j, k: (i, k)),
        pl.BlockSpec((tk, tn), lambda i, j, k: (k, j)),
        pl.BlockSpec((1, tn), lambda i, j, k: (0, j)),
        pl.BlockSpec((1, tn), lambda i, j, k: (0, j)),
    ]
    inputs = [ap, wp, sp, bp]
    if has_res:
        rp = jnp.zeros((Mp, Np), jnp.bfloat16).at[:M, :N].set(
            residual.astype(jnp.bfloat16))
        in_specs.append(pl.BlockSpec((tm, tn), lambda i, j, k: (i, j)))
        inputs.append(rp)

    out = pl.pallas_call(
        _make_fused_kernel(relu, has_res),
        out_shape=jax.ShapeDtypeStruct((Mp, Np), jnp.bfloat16),
        grid_spec=pltpu.PrefetchScalarGridSpec(
            num_scalar_prefetch=0,
            grid=(Mp // tm, Np // tn, Kp // tk),
            in_specs=in_specs,
            out_specs=pl.BlockSpec((tm, tn), lambda i, j, k: (i, j)),
            scratch_shapes=[pltpu.VMEM((tm, tn), jnp.float32)],
        ),
        compiler_params=pltpu.CompilerParams(
            dimension_semantics=("parallel", "parallel", "arbitrary")),
    )(*inputs)
    return out[:M, :N]


def _maxpool_kernel(x_ref, o_ref):
    # x_ref: (9, TM, Cp) shifted window slices -> elementwise max over axis 0.
    o_ref[...] = jnp.max(x_ref[...], axis=0)


@jax.jit
def maxpool3x3_s2(x):
    """3x3 max pool, stride 2, padding 1 (PyTorch semantics).  x: NHWC bf16."""
    N, H, W, C = x.shape
    Hout = (H + 2 - 3) // 2 + 1
    Wout = (W + 2 - 3) // 2 + 1
    xp = jnp.pad(x, ((0, 0), (1, 1), (1, 1), (0, 0)),
                 constant_values=-jnp.inf)
    cols = []
    for i in range(3):
        for j in range(3):
            sl = jax.lax.slice(
                xp,
                (0, i, j, 0),
                (N, i + (Hout - 1) * 2 + 1, j + (Wout - 1) * 2 + 1, C),
                (1, 2, 2, 1))
            cols.append(sl.reshape(N * Hout * Wout, C))
    stacked = jnp.stack(cols, axis=0)  # (9, M, C)
    M = N * Hout * Wout
    tm = min(512, _ceil_to(M, 16))
    Mp = _ceil_to(M, tm)
    Cp = _ceil_to(C, 128)
    sp = jnp.full((9, Mp, Cp), -jnp.inf, x.dtype).at[:, :M, :C].set(stacked)

    out = pl.pallas_call(
        _maxpool_kernel,
        out_shape=jax.ShapeDtypeStruct((Mp, Cp), x.dtype),
        grid_spec=pltpu.PrefetchScalarGridSpec(
            num_scalar_prefetch=0,
            grid=(Mp // tm,),
            in_specs=[pl.BlockSpec((9, tm, Cp), lambda i: (0, i, 0))],
            out_specs=pl.BlockSpec((tm, Cp), lambda i: (i, 0)),
        ),
        compiler_params=pltpu.CompilerParams(
            dimension_semantics=("parallel",)),
    )(sp)
    return out[:M, :C].reshape(N, Hout, Wout, C)


# --------------------------------------------------------------------------
# Convolution = im2col (JAX glue) + fused Pallas matmul
# --------------------------------------------------------------------------
@functools.partial(jax.jit,
                   static_argnames=("stride", "padding", "dilation", "relu"))
def conv2d_bn(x, w_hwio, scale, bias, residual=None, *, stride=1, padding=0,
              dilation=1, relu=True):
    """x: NHWC bf16, w_hwio: (kh, kw, Cin, Cout).  BN folded to scale/bias."""
    N, H, W, C = x.shape
    kh, kw, _, Cout = w_hwio.shape
    Hout = (H + 2 * padding - dilation * (kh - 1) - 1) // stride + 1
    Wout = (W + 2 * padding - dilation * (kw - 1) - 1) // stride + 1

    if kh == 1 and kw == 1 and padding == 0:
        patches = x[:, ::stride, ::stride, :].reshape(N * Hout * Wout, C)
    else:
        # TODO(synk): im2col patches are still materialized in HBM (bf16);
        #             an implicit-im2col kernel (tap axis on the grid) would
        #             remove this extra HBM round-trip for the 3x3/7x7 convs.
        xp = jnp.pad(x, ((0, 0), (padding, padding), (padding, padding),
                         (0, 0)))
        cols = []
        for i in range(kh):
            for j in range(kw):
                h0 = i * dilation
                w0 = j * dilation
                sl = jax.lax.slice(
                    xp,
                    (0, h0, w0, 0),
                    (N, h0 + (Hout - 1) * stride + 1,
                     w0 + (Wout - 1) * stride + 1, C),
                    (1, stride, stride, 1))
                cols.append(sl)
        patches = jnp.concatenate(cols, axis=-1).reshape(
            N * Hout * Wout, kh * kw * C)

    wmat = w_hwio.reshape(kh * kw * C, Cout)
    res2d = None if residual is None else residual.reshape(
        N * Hout * Wout, Cout)
    y = fused_matmul_bn(patches, wmat, scale, bias, res2d, relu=relu)
    return y.reshape(N, Hout, Wout, Cout)


# --------------------------------------------------------------------------
# Deterministic parameter init (ResNet-152 shapes)
# --------------------------------------------------------------------------
_BN_EPS = 1e-5


def _he(key, shape):
    fan_in = shape[0] * shape[1] * shape[2]
    return (jax.random.normal(key, shape, dtype=jnp.float32)
            * jnp.sqrt(2.0 / fan_in))


def _bn(c):
    gamma = jnp.ones((c,), jnp.float32)
    beta = jnp.zeros((c,), jnp.float32)
    r_mean = jnp.zeros((c,), jnp.float32)
    r_var = jnp.ones((c,), jnp.float32)
    scale = gamma / jnp.sqrt(r_var + _BN_EPS)
    bias = beta - r_mean * scale
    return scale, bias


def init_params(seed=0):
    base = jax.random.PRNGKey(seed)
    counter = iter(range(1 << 20))

    def nk():
        return jax.random.fold_in(base, next(counter))

    def block(inplanes, planes, has_down):
        p = {
            "c1": _he(nk(), (1, 1, inplanes, planes)), "bn1": _bn(planes),
            "c2": _he(nk(), (3, 3, planes, planes)), "bn2": _bn(planes),
            "c3": _he(nk(), (1, 1, planes, planes * 4)), "bn3": _bn(planes * 4),
        }
        if has_down:
            p["cd"] = _he(nk(), (1, 1, inplanes, planes * 4))
            p["bnd"] = _bn(planes * 4)
        return p

    def layer(inplanes, planes, nblocks, stride):
        blocks = []
        for i in range(nblocks):
            has_down = (i == 0) and (stride != 1 or inplanes != planes * 4)
            blocks.append(block(inplanes if i == 0 else planes * 4,
                                planes, has_down))
        return blocks

    params = {"layer0": {"w": _he(nk(), (7, 7, 3, 64)), "bn": _bn(64)}}
    params["layer1"] = layer(64, 64, 3, 1)        # ResNet-152: [3, 8, 36, 3]
    params["layer2"] = layer(256, 128, 8, 2)
    params["layer3"] = layer(512, 256, 36, 2)
    params["layer4"] = layer(1024, 512, 3, 2)
    return params


# --------------------------------------------------------------------------
# Forward pass (matches Atrous_ResNet_features.forward)
# --------------------------------------------------------------------------
def _run_layer(x, blocks, stride, dil_fn):
    for i, p in enumerate(blocks):
        s = stride if i == 0 else 1
        d = dil_fn(i)
        identity = x
        out = conv2d_bn(x, p["c1"], *p["bn1"], stride=1, padding=0,
                        dilation=1, relu=True)
        out = conv2d_bn(out, p["c2"], *p["bn2"], stride=s, padding=d,
                        dilation=d, relu=True)
        if "cd" in p:
            identity = conv2d_bn(x, p["cd"], *p["bnd"], stride=s, padding=0,
                                 dilation=1, relu=False)
        x = conv2d_bn(out, p["c3"], *p["bn3"], stride=1, padding=0,
                      dilation=1, relu=True, residual=identity)
    return x


def atrous_resnet_features(x_nchw, params):
    # layout: input NCHW -> internal NHWC bf16 -> outputs NCHW f32
    x = jnp.transpose(x_nchw, (0, 2, 3, 1)).astype(jnp.bfloat16)

    # layer0: conv7x7/s2/p3 + BN + ReLU + maxpool3x3/s2/p1
    x = conv2d_bn(x, params["layer0"]["w"], *params["layer0"]["bn"],
                  stride=2, padding=3, dilation=1, relu=True)
    x = maxpool3x3_s2(x)

    x1 = _run_layer(x, params["layer1"], stride=1, dil_fn=lambda i: 1)
    x2 = _run_layer(x1, params["layer2"], stride=2, dil_fn=lambda i: 1)
    # layer3: dilation/padding cycle [1, 2, 5, 9]
    x3 = _run_layer(x2, params["layer3"], stride=2,
                    dil_fn=lambda i: [1, 2, 5, 9][i % 4])
    # layer4: dilation/padding [5, 9, 17]
    x4 = _run_layer(x3, params["layer4"], stride=2,
                    dil_fn=lambda i: [5, 9, 17][i])

    to_nchw = lambda t: jnp.transpose(t, (0, 3, 1, 2)).astype(jnp.float32)
    return to_nchw(x1), to_nchw(x2), to_nchw(x3), to_nchw(x4)


# --------------------------------------------------------------------------
if __name__ == "__main__":
    params = init_params(seed=0)
    x = jax.random.normal(jax.random.PRNGKey(0), (2, 3, 64, 64),
                          dtype=jnp.float32)
    x1, x2, x3, x4 = atrous_resnet_features(x, params)
    jax.block_until_ready((x1, x2, x3, x4))
    assert x1.shape == (2, 256, 16, 16), x1.shape
    assert x2.shape == (2, 512, 8, 8), x2.shape
    assert x3.shape == (2, 1024, 4, 4), x3.shape
    assert x4.shape == (2, 2048, 2, 2), x4.shape
    print("KERNEL_OK")
</pallas_src>

<mosaic_0001>
module attributes {stable_mosaic.version = 11 : i64} {
  func.func @kernel(%arg0: i32, %arg1: i32, %arg2: i32, %arg3: memref<256x256xbf16, #tpu.memory_space<vmem>>, %arg4: memref<256x128xbf16, #tpu.memory_space<vmem>>, %arg5: memref<1x128xf32, #tpu.memory_space<vmem>>, %arg6: memref<1x128xf32, #tpu.memory_space<vmem>>, %arg7: memref<256x128xbf16, #tpu.memory_space<vmem>>, %arg8: memref<256x128xf32, #tpu.memory_space<vmem>>) attributes {dimension_semantics = [#tpu.dimension_semantics<parallel>, #tpu.dimension_semantics<parallel>, #tpu.dimension_semantics<arbitrary>], iteration_bounds = array<i64: 8, 1, 1>, scalar_prefetch = 0 : i64, scratch_operands = 1 : i64, tpu.core_type = #tpu.core_type<tc>, window_params = [{transform_indices = @transform_0, window_bounds = array<i64: 256, 256>}, {transform_indices = @transform_1, window_bounds = array<i64: 256, 128>}, {transform_indices = @transform_2, window_bounds = array<i64: 1, 128>}, {transform_indices = @transform_3, window_bounds = array<i64: 1, 128>}, {transform_indices = @transform_4, window_bounds = array<i64: 256, 128>}]} {
    %c0_i32 = arith.constant 0 : i32
    %0 = arith.cmpi eq, %arg2, %c0_i32 : i32
    %1 = arith.extui %0 : i1 to i32
    %c0_i32_0 = arith.constant 0 : i32
    %2 = arith.cmpi ne, %1, %c0_i32_0 : i32
    scf.if %2 {
      %cst_10 = arith.constant 0.000000e+00 : f32
      %12 = vector.broadcast %cst_10 : f32 to vector<256x128xf32>
      %c0_11 = arith.constant 0 : index
      %c0_12 = arith.constant 0 : index
      %13 = vector.load %arg8[%c0_11, %c0_12] : memref<256x128xf32, #tpu.memory_space<vmem>>, vector<256x128xf32>
      tpu.vector_store %arg8[%c0_11, %c0_12], %12 {strides = array<i32>} : memref<256x128xf32, #tpu.memory_space<vmem>>, vector<256x128xf32>,
    } else {
    }
    %c0 = arith.constant 0 : index
    %c0_1 = arith.constant 0 : index
    %3 = vector.load %arg8[%c0, %c0_1] : memref<256x128xf32, #tpu.memory_space<vmem>>, vector<256x128xf32>
    %c0_2 = arith.constant 0 : index
    %c0_3 = arith.constant 0 : index
    %4 = vector.load %arg3[%c0_2, %c0_3] : memref<256x256xbf16, #tpu.memory_space<vmem>>, vector<256x256xbf16>
    %c0_4 = arith.constant 0 : index
    %c0_5 = arith.constant 0 : index
    %5 = vector.load %arg4[%c0_4, %c0_5] : memref<256x128xbf16, #tpu.memory_space<vmem>>, vector<256x128xbf16>
    %cst = arith.constant dense<0.000000e+00> : vector<256x128xf32>
    %6 = tpu.matmul %4, %5, %cst {dimension_numbers = #tpu.dot_dimension_numbers<[1], [0], [0], [1], [0, 0, 1, 1], [], []>} : vector<256x256xbf16>, vector<256x128xbf16>, vector<256x128xf32> -> vector<256x128xf32>
    %7 = arith.addf %3, %6 : vector<256x128xf32>
    %c0_6 = arith.constant 0 : index
    %c0_7 = arith.constant 0 : index
    %8 = vector.load %arg8[%c0_6, %c0_7] : memref<256x128xf32, #tpu.memory_space<vmem>>, vector<256x128xf32>
    tpu.vector_store %arg8[%c0_6, %c0_7], %7 {strides = array<i32>} : memref<256x128xf32, #tpu.memory_space<vmem>>, vector<256x128xf32>,
    %c0_i32_8 = arith.constant 0 : i32
    %9 = arith.cmpi eq, %arg2, %c0_i32_8 : i32
    %10 = arith.extui %9 : i1 to i32
    %c0_i32_9 = arith.constant 0 : i32
    %11 = arith.cmpi ne, %10, %c0_i32_9 : i32
    scf.if %11 {
      %c0_10 = arith.constant 0 : index
      %c0_11 = arith.constant 0 : index
      %12 = vector.load %arg8[%c0_10, %c0_11] : memref<256x128xf32, #tpu.memory_space<vmem>>, vector<256x128xf32>
      %c0_12 = arith.constant 0 : index
      %c0_13 = arith.constant 0 : index
      %13 = vector.load %arg5[%c0_12, %c0_13] : memref<1x128xf32, #tpu.memory_space<vmem>>, vector<1x128xf32>
      %14 = vector.broadcast %13 : vector<1x128xf32> to vector<256x128xf32>
      %15 = arith.mulf %12, %14 : vector<256x128xf32>
      %c0_14 = arith.constant 0 : index
      %c0_15 = arith.constant 0 : index
      %16 = vector.load %arg6[%c0_14, %c0_15] : memref<1x128xf32, #tpu.memory_space<vmem>>, vector<1x128xf32>
      %17 = vector.broadcast %16 : vector<1x128xf32> to vector<256x128xf32>
      %18 = arith.addf %15, %17 : vector<256x128xf32>
      %cst_16 = arith.constant 0.000000e+00 : f32
      %19 = vector.broadcast %cst_16 : f32 to vector<256x128xf32>
      %20 = arith.maximumf %18, %19 : vector<256x128xf32>
      %21 = arith.truncf %20 : vector<256x128xf32> to vector<256x128xbf16>
      %c0_17 = arith.constant 0 : index
      %c0_18 = arith.constant 0 : index
      %22 = vector.load %arg7[%c0_17, %c0_18] : memref<256x128xbf16, #tpu.memory_space<vmem>>, vector<256x128xbf16>
      tpu.vector_store %arg7[%c0_17, %c0_18], %21 {strides = array<i32>} : memref<256x128xbf16, #tpu.memory_space<vmem>>, vector<256x128xbf16>,
    } else {
    }
    return
  }
  func.func @transform_0(%arg0: i32, %arg1: i32, %arg2: i32) -> (i32, i32) {
    %c0_i32 = arith.constant 0 : i32
    return %arg0, %arg2 : i32, i32
  }
  func.func @transform_1(%arg0: i32, %arg1: i32, %arg2: i32) -> (i32, i32) {
    %c0_i32 = arith.constant 0 : i32
    return %arg2, %arg1 : i32, i32
  }
  func.func @transform_2(%arg0: i32, %arg1: i32, %arg2: i32) -> (i32, i32) {
    %c0_i32 = arith.constant 0 : i32
    %c0_i32_0 = arith.constant 0 : i32
    return %c0_i32, %arg1 : i32, i32
  }
  func.func @transform_3(%arg0: i32, %arg1: i32, %arg2: i32) -> (i32, i32) {
    %c0_i32 = arith.constant 0 : i32
    %c0_i32_0 = arith.constant 0 : i32
    return %c0_i32, %arg1 : i32, i32
  }
  func.func @transform_4(%arg0: i32, %arg1: i32, %arg2: i32) -> (i32, i32) {
    %c0_i32 = arith.constant 0 : i32
    return %arg0, %arg1 : i32, i32
  }
}

</mosaic_0001>

<llo_original>
// kernel: fused_matmul_bn.1
$region0: #{fused_matmul_bn.1}
  #allocation0 [shape = 'u32[]', space=smem, size = 0x4, offset = 0x4, fixed_abs, tag = 'smem constant byte address 0x4 - core index']
  #allocation1 [shape = 'u32[144,128]{1,0:T(1,128)}', space=vmem, size = 0x12000, scoped, tag = 'internal scratch']
  #allocation2 [shape = 'f32[256,128]{1,0:T(8,128)}', space=vmem, size = 0x20000, scoped, tag = 'scratch operand']
  %s0 = inlined_call_operand.vmem [shape: bf16[2048,256], index: 0, kind: input, shape index: {}]
  %s1 = inlined_call_operand.vmem [shape: bf16[256,128], index: 1, kind: input, shape index: {}]
  %s2 = inlined_call_operand.vmem [shape: f32[1,128], index: 2, kind: input, shape index: {}]
  %s3 = inlined_call_operand.vmem [shape: f32[1,128], index: 3, kind: input, shape index: {}]
  %s4 = inlined_call_operand.vmem [shape: bf16[2048,128], index: 4, kind: output, shape index: {}]
  %s5 = sld [smem:[#allocation0]]
  $region57: #{fused_matmul_bn.1} parent=0
    _
  %s7 = ssub.s32 1, %s5
  %s8 = scalar_select 0, %s7, %s5
  loop: start=0, step=1, limit=10
  $region2: #{fused_matmul_bn.1} parent=0 // loop_pre_header
    _
  $region3: #{fused_matmul_bn.1} parent=0 // loop_header
    %s10 = sphi 0, %s14
    %p11 = scmp.ge.s32.totalorder %s10, 10
    %s17 = sphi 0, %s36
    %s18 = sphi 0, %s32
    %s19 = sphi 0, %s28
    %s20 = sphi 0, %s17
    %s21 = sphi 0, %s18
    %s22 = sphi 0, %s19
    %s23 = sphi 0, %s20
    %s24 = sphi 0, %s21
    %s25 = sphi 0, %s22
    %s41 = sphi 0, %s43
    %s44 = sphi 0, %s41
    %s45 = sphi 0, %s44
    %s61 = sphi 0, %s45
    %s69 = sphi 0, %s71
    %s72 = sphi 0, %s69
    %s73 = sphi 0, %s72
    %s89 = sphi 0, %s73
    %s95 = sphi 0, %s97
    %s98 = sphi 0, %s95
    %s99 = sphi 0, %s98
    %s115 = sphi 0, %s99
    %s121 = sphi 0, %s123
    %s124 = sphi 0, %s121
    %s125 = sphi 0, %s124
    %s141 = sphi 0, %s125
    %s149 = sphi 0, %s151
    %s152 = sphi 0, %s149
    %s153 = sphi 0, %s152
    %s169 = sphi 0, %s153
  $region4: #{fused_matmul_bn.1} parent=0 // loop_header_branch
    %13 = sbr.rel (%p11) target = $region8
  $region5: #{fused_matmul_bn.1} parent=0 // loop_body
    %s15 = ssub.s32 %s10, 1
    %s16 = ssub.s32 %s10, 2
    %s26 = sadd.s32 1, %s19
    %p27 = scmp.ge.s32.totalorder %s26, 1
    %s28 = scalar_select %p27, 0, %s26
    %s29 = sadd.s32 1, %s18
    %s30 = scalar_select %p27, %s29, %s18
    %p31 = scmp.ge.s32.totalorder %s30, 1
    %s32 = scalar_select %p31, 0, %s30
    %s33 = sadd.s32 1, %s17
    %s34 = scalar_select %p31, %s33, %s17
    %p35 = scmp.ge.s32.totalorder %s34, 8
    %s36 = scalar_select %p35, 0, %s34
    %s37 = ssub.s32 %s17, %s36
    %s38 = ssub.s32 %s19, %s28
    %s39 = sor.u32 %s37, %s38
    %p40 = scmp.eq.s32.totalorder %s39, 0
    %s42 = sadd.s32 %s41, 1
    %s43 = scalar_select %p40, %s41, %s42
    %p46 = pneg %p40
    %p47 = scmp.eq.s32.totalorder %s10, 7
    %p48 = por %p46, %p47
    %p49 = scmp.ne.s32.totalorder %s41, %s44
    %p50 = scmp.eq.s32.totalorder %s10, 0
    %p51 = por %p49, %p50
    %p52 = scmp.ne.s32.totalorder %s41, %s44
    %p53 = scmp.eq.s32.totalorder %s15, 7
    %p54 = por %p52, %p53
    %p55 = scmp.ne.s32.totalorder %s44, %s45
    %p56 = scmp.eq.s32.totalorder %s15, 0
    %p57 = por %p55, %p56
    %p58 = scmp.ne.s32.totalorder %s44, %s45
    %p59 = scmp.eq.s32.totalorder %s16, 7
    %p60 = por %p58, %p59
    %p62 = scmp.ne.s32.totalorder %s45, %s61
    %p63 = scmp.eq.s32.totalorder %s16, 0
    %p64 = por %p62, %p63
    %s65 = ssub.s32 %s19, %s28
    %s66 = ssub.s32 %s18, %s32
    %s67 = sor.u32 %s65, %s66
    %p68 = scmp.eq.s32.totalorder %s67, 0
    %s70 = sadd.s32 %s69, 1
    %s71 = scalar_select %p68, %s69, %s70
    %p74 = pneg %p68
    %p75 = scmp.eq.s32.totalorder %s10, 7
    %p76 = por %p74, %p75
    %p77 = scmp.ne.s32.totalorder %s69, %s72
    %p78 = scmp.eq.s32.totalorder %s10, 0
    %p79 = por %p77, %p78
    %p80 = scmp.ne.s32.totalorder %s69, %s72
    %p81 = scmp.eq.s32.totalorder %s15, 7
    %p82 = por %p80, %p81
    %p83 = scmp.ne.s32.totalorder %s72, %s73
    %p84 = scmp.eq.s32.totalorder %s15, 0
    %p85 = por %p83, %p84
    %p86 = scmp.ne.s32.totalorder %s72, %s73
    %p87 = scmp.eq.s32.totalorder %s16, 7
    %p88 = por %p86, %p87
    %p90 = scmp.ne.s32.totalorder %s73, %s89
    %p91 = scmp.eq.s32.totalorder %s16, 0
    %p92 = por %p90, %p91
    %s93 = ssub.s32 %s18, %s32
    %p94 = scmp.eq.s32.totalorder %s93, 0
    %s96 = sadd.s32 %s95, 1
    %s97 = scalar_select %p94, %s95, %s96
    %p100 = pneg %p94
    %p101 = scmp.eq.s32.totalorder %s10, 7
    %p102 = por %p100, %p101
    %p103 = scmp.ne.s32.totalorder %s95, %s98
    %p104 = scmp.eq.s32.totalorder %s10, 0
    %p105 = por %p103, %p104
    %p106 = scmp.ne.s32.totalorder %s95, %s98
    %p107 = scmp.eq.s32.totalorder %s15, 7
    %p108 = por %p106, %p107
    %p109 = scmp.ne.s32.totalorder %s98, %s99
    %p110 = scmp.eq.s32.totalorder %s15, 0
    %p111 = por %p109, %p110
    %p112 = scmp.ne.s32.totalorder %s98, %s99
    %p113 = scmp.eq.s32.totalorder %s16, 7
    %p114 = por %p112, %p113
    %p116 = scmp.ne.s32.totalorder %s99, %s115
    %p117 = scmp.eq.s32.totalorder %s16, 0
    %p118 = por %p116, %p117
    %s119 = ssub.s32 %s18, %s32
    %p120 = scmp.eq.s32.totalorder %s119, 0
    %s122 = sadd.s32 %s121, 1
    %s123 = scalar_select %p120, %s121, %s122
    %p126 = pneg %p120
    %p127 = scmp.eq.s32.totalorder %s10, 7
    %p128 = por %p126, %p127
    %p129 = scmp.ne.s32.totalorder %s121, %s124
    %p130 = scmp.eq.s32.totalorder %s10, 0
    %p131 = por %p129, %p130
    %p132 = scmp.ne.s32.totalorder %s121, %s124
    %p133 = scmp.eq.s32.totalorder %s15, 7
    %p134 = por %p132, %p133
    %p135 = scmp.ne.s32.totalorder %s124, %s125
    %p136 = scmp.eq.s32.totalorder %s15, 0
    %p137 = por %p135, %p136
    %p138 = scmp.ne.s32.totalorder %s124, %s125
    %p139 = scmp.eq.s32.totalorder %s16, 7
    %p140 = por %p138, %p139
    %p142 = scmp.ne.s32.totalorder %s125, %s141
    %p143 = scmp.eq.s32.totalorder %s16, 0
    %p144 = por %p142, %p143
    %s145 = ssub.s32 %s17, %s36
    %s146 = ssub.s32 %s18, %s32
    %s147 = sor.u32 %s145, %s146
    %p148 = scmp.eq.s32.totalorder %s147, 0
    %s150 = sadd.s32 %s149, 1
    %s151 = scalar_select %p148, %s149, %s150
    %p154 = pneg %p148
    %p155 = scmp.eq.s32.totalorder %s10, 7
    %p156 = por %p154, %p155
    %p157 = scmp.ne.s32.totalorder %s149, %s152
    %p158 = scmp.eq.s32.totalorder %s10, 0
    %p159 = por %p157, %p158
    %p160 = scmp.ne.s32.totalorder %s149, %s152
    %p161 = scmp.eq.s32.totalorder %s15, 7
    %p162 = por %p160, %p161
    %p163 = scmp.ne.s32.totalorder %s152, %s153
    %p164 = scmp.eq.s32.totalorder %s15, 0
    %p165 = por %p163, %p164
    %p166 = scmp.ne.s32.totalorder %s152, %s153
    %p167 = scmp.eq.s32.totalorder %s16, 7
    %p168 = por %p166, %p167
    %p170 = scmp.ne.s32.totalorder %s153, %s169
    %p171 = scmp.eq.s32.totalorder %s16, 0
    %p172 = por %p170, %p171
    %p173 = scmp.le.s32.totalorder 1, %s10
    %p174 = scmp.lt.s32.totalorder %s10, 9
    %p175 = pnand %p173, %p174
    %p176 = pneg %p175
    // Predicated region
    $region9: #{fused_matmul_bn.1} parent=5 // pred_check
      _
    $region10: #{fused_matmul_bn.1} parent=5 // pred_check_branch
      %178 = sbr.rel (%p175) target = $region12
    $region11: #{fused_matmul_bn.1} parent=5 // pred_region
      %s179 = ssub.s32 %s10, 1
      // Predicated region
      $region13: #{fused_matmul_bn.1} parent=11 // pred_check
        %p180 = pneg %p85
      $region14: #{fused_matmul_bn.1} parent=11 // pred_check_branch
        %182 = sbr.rel (%p180) target = $region16
      $region15: #{fused_matmul_bn.1} parent=11 // pred_region
        %s183 = smul.u32 32, %s22
        %p184 = scmp.lt.s32.totalorder %s183, 31
        %s185 = scalar_select %p184, %s183, 31
        %p186 = scmp.lt.s32.totalorder %s21, 0
        %s187 = scalar_select %p186, %s21, 0
        %s188 = sadd.s32 %s187, %s185
        %s189 = smul.addr %s188, 4
        %s190 = scalar_lea.vmem %s1, %s189
        %s191 = smul.u32 32, %s22
      $region16: #{fused_matmul_bn.1} parent=11 // pred_fallthru
        _
      // Predicated region
      $region17: #{fused_matmul_bn.1} parent=11 // pred_check
        %p192 = pneg %p111
      $region18: #{fused_matmul_bn.1} parent=11 // pred_check_branch
        %194 = sbr.rel (%p192) target = $region20
      $region19: #{fused_matmul_bn.1} parent=11 // pred_region
        %p195 = scmp.lt.s32.totalorder %s21, 0
        %s196 = scalar_select %p195, %s21, 0
        %s197 = scalar_lea.vmem %s2, %s196
      $region20: #{fused_matmul_bn.1} parent=11 // pred_fallthru
        _
      // Predicated region
      $region21: #{fused_matmul_bn.1} parent=11 // pred_check
        %p198 = pneg %p137
      $region22: #{fused_matmul_bn.1} parent=11 // pred_check_branch
        %200 = sbr.rel (%p198) target = $region24
      $region23: #{fused_matmul_bn.1} parent=11 // pred_region
        %p201 = scmp.lt.s32.totalorder %s21, 0
        %s202 = scalar_select %p201, %s21, 0
        %s203 = scalar_lea.vmem %s3, %s202
      $region24: #{fused_matmul_bn.1} parent=11 // pred_fallthru
        _
    $region12: #{fused_matmul_bn.1} parent=5 // pred_fallthru
      _
    %p204 = scmp.lt.s32.totalorder %s10, 8
    // Predicated region
    $region25: #{fused_matmul_bn.1} parent=5 // pred_check
      %p205 = pneg %p204
    $region26: #{fused_matmul_bn.1} parent=5 // pred_check_branch
      %207 = sbr.rel (%p205) target = $region28
    $region27: #{fused_matmul_bn.1} parent=5 // pred_region
      // Predicated region
      $region29: #{fused_matmul_bn.1} parent=27 // pred_check
        %p208 = pneg %p51
      $region30: #{fused_matmul_bn.1} parent=27 // pred_check_branch
        %210 = sbr.rel (%p208) target = $region32
      $region31: #{fused_matmul_bn.1} parent=27 // pred_region
        %s211 = smul.u32 32, %s17
        %s212 = smul.u32 2, %s19
        %p213 = scmp.lt.s32.totalorder %s211, 255
        %s214 = scalar_select %p213, %s211, 255
        %p215 = scmp.lt.s32.totalorder %s212, 1
        %s216 = scalar_select %p215, %s212, 1
        %s217 = smul.addr %s214, 2
        %s218 = sadd.s32 %s216, %s217
        %s219 = smul.addr %s218, 4
        %s220 = scalar_lea.vmem %s0, %s219
        %s221 = smul.u32 32, %s17
        %s222 = smul.u32 2, %s19
      $region32: #{fused_matmul_bn.1} parent=27 // pred_fallthru
        _
    $region28: #{fused_matmul_bn.1} parent=5 // pred_fallthru
      _
    %p223 = scmp.le.s32.totalorder 1, %s10
    %p224 = scmp.lt.s32.totalorder %s10, 9
    %p225 = pnand %p223, %p224
    %p226 = pneg %p225
    // Predicated region
    $region33: #{fused_matmul_bn.1} parent=5 // pred_check
      _
    $region34: #{fused_matmul_bn.1} parent=5 // pred_check_branch
      %228 = sbr.rel (%p225) target = $region36
    $region35: #{fused_matmul_bn.1} parent=5 // pred_region
      %s229 = ssub.s32 %s10, 1
      %s230 = smul.u32 32, %s20
      %s231 = smul.u32 2, %s22
      %p232 = scmp.lt.s32.totalorder %s230, 255
      %s233 = scalar_select %p232, %s230, 255
      %p234 = scmp.lt.s32.totalorder %s231, 1
      %s235 = scalar_select %p234, %s231, 1
      %s236 = smul.addr %s233, 2
      %s237 = sadd.s32 %s235, %s236
      %s238 = smul.addr %s237, 4
      %s239 = scalar_lea.vmem %s0, %s238
      %p240 = pneg %p57
      %p241 = pneg %p54
      %s242 = smul.u32 32, %s22
      %p243 = scmp.lt.s32.totalorder %s242, 31
      %s244 = scalar_select %p243, %s242, 31
      %p245 = scmp.lt.s32.totalorder %s21, 0
      %s246 = scalar_select %p245, %s21, 0
      %s247 = sadd.s32 %s246, %s244
      %s248 = smul.addr %s247, 4
      %s249 = scalar_lea.vmem %s1, %s248
      %p250 = pneg %p85
      %p251 = pneg %p82
      %p252 = scmp.lt.s32.totalorder %s21, 0
      %s253 = scalar_select %p252, %s21, 0
      %s254 = scalar_lea.vmem %s2, %s253
      %p255 = pneg %p111
      %p256 = pneg %p108
      %p257 = scmp.lt.s32.totalorder %s21, 0
      %s258 = scalar_select %p257, %s21, 0
      %s259 = scalar_lea.vmem %s3, %s258
      %p260 = pneg %p137
      %p261 = pneg %p134
      %p262 = pneg %p165
      %p263 = pneg %p162
      %s264 = smul.u32 32, %s20
      %p265 = scmp.lt.s32.totalorder %s264, 255
      %s266 = scalar_select %p265, %s264, 255
      %p267 = scmp.lt.s32.totalorder %s21, 0
      %s268 = scalar_select %p267, %s21, 0
      %s269 = sadd.s32 %s268, %s266
      %s270 = smul.addr %s269, 4
      %s271 = scalar_lea.vmem %s4, %s270
      %s272 = smul.u32 32, %s20
      %s273 = smul.u32 2, %s22
      %p274 = scmp.lt.s32.totalorder %s272, 255
      %s275 = scalar_select %p274, %s272, 255
      %p276 = scmp.lt.s32.totalorder %s273, 1
      %s277 = scalar_select %p276, %s273, 1
      %s278 = smul.addr %s275, 2
      %s279 = sadd.s32 %s277, %s278
      %s280 = smul.addr %s279, 4
      %s281 = scalar_lea.vmem %s0, %s280
      %s282 = smul.u32 32, %s20
      %s283 = smul.u32 2, %s22
      %s284 = smul.u32 32, %s22
      %p285 = scmp.lt.s32.totalorder %s284, 31
      %s286 = scalar_select %p285, %s284, 31
      %p287 = scmp.lt.s32.totalorder %s21, 0
      %s288 = scalar_select %p287, %s21, 0
      %s289 = sadd.s32 %s288, %s286
      %s290 = smul.addr %s289, 4
      %s291 = scalar_lea.vmem %s1, %s290
      %s292 = smul.u32 32, %s22
      %p293 = scmp.lt.s32.totalorder %s21, 0
      %s294 = scalar_select %p293, %s21, 0
      %s295 = scalar_lea.vmem %s2, %s294
      %p296 = scmp.lt.s32.totalorder %s21, 0
      %s297 = scalar_select %p296, %s21, 0
      %s298 = scalar_lea.vmem %s3, %s297
      %s299 = smul.u32 32, %s20
      %p300 = scmp.lt.s32.totalorder %s299, 255
      %s301 = scalar_select %p300, %s299, 255
      %p302 = scmp.lt.s32.totalorder %s21, 0
      %s303 = scalar_select %p302, %s21, 0
      %s304 = sadd.s32 %s303, %s301
      %s305 = smul.addr %s304, 4
      %s306 = scalar_lea.vmem %s4, %s305
      %s307 = smul.u32 32, %s20
      %p309 = scmp.eq.s32.totalorder %s22, 0
      // Predicated region
      $region37: #{fused_matmul_bn.1} parent=35 // pred_check
        %p310 = pneg %p309
      $region38: #{fused_matmul_bn.1} parent=35 // pred_check_branch
        %312 = sbr.rel (%p310) target = $region40
      $region39: #{fused_matmul_bn.1} parent=35 // pred_region
        %313 = vst [vmem:[#allocation2] sm:$0xff] 0.0
        %314 = vst [vmem:[#allocation2 + $0x8] sm:$0xff] 0.0
        %315 = vst [vmem:[#allocation2 + $0x10] sm:$0xff] 0.0
        %316 = vst [vmem:[#allocation2 + $0x18] sm:$0xff] 0.0
        %317 = vst [vmem:[#allocation2 + $0x20] sm:$0xff] 0.0
        %318 = vst [vmem:[#allocation2 + $0x28] sm:$0xff] 0.0
        %319 = vst [vmem:[#allocation2 + $0x30] sm:$0xff] 0.0
        %320 = vst [vmem:[#allocation2 + $0x38] sm:$0xff] 0.0
        %321 = vst [vmem:[#allocation2 + $0x40] sm:$0xff] 0.0
        %322 = vst [vmem:[#allocation2 + $0x48] sm:$0xff] 0.0
        %323 = vst [vmem:[#allocation2 + $0x50] sm:$0xff] 0.0
        %324 = vst [vmem:[#allocation2 + $0x58] sm:$0xff] 0.0
        %325 = vst [vmem:[#allocation2 + $0x60] sm:$0xff] 0.0
        %326 = vst [vmem:[#allocation2 + $0x68] sm:$0xff] 0.0
        %327 = vst [vmem:[#allocation2 + $0x70] sm:$0xff] 0.0
        %328 = vst [vmem:[#allocation2 + $0x78] sm:$0xff] 0.0
        %329 = vst [vmem:[#allocation2 + $0x80] sm:$0xff] 0.0
        %330 = vst [vmem:[#allocation2 + $0x88] sm:$0xff] 0.0
        %331 = vst [vmem:[#allocation2 + $0x90] sm:$0xff] 0.0
        %332 = vst [vmem:[#allocation2 + $0x98] sm:$0xff] 0.0
        %333 = vst [vmem:[#allocation2 + $0xa0] sm:$0xff] 0.0
        %334 = vst [vmem:[#allocation2 + $0xa8] sm:$0xff] 0.0
        %335 = vst [vmem:[#allocation2 + $0xb0] sm:$0xff] 0.0
        %336 = vst [vmem:[#allocation2 + $0xb8] sm:$0xff] 0.0
        %337 = vst [vmem:[#allocation2 + $0xc0] sm:$0xff] 0.0
        %338 = vst [vmem:[#allocation2 + $0xc8] sm:$0xff] 0.0
        %339 = vst [vmem:[#allocation2 + $0xd0] sm:$0xff] 0.0
        %340 = vst [vmem:[#allocation2 + $0xd8] sm:$0xff] 0.0
        %341 = vst [vmem:[#allocation2 + $0xe0] sm:$0xff] 0.0
        %342 = vst [vmem:[#allocation2 + $0xe8] sm:$0xff] 0.0
        %343 = vst [vmem:[#allocation2 + $0xf0] sm:$0xff] 0.0
        %344 = vst [vmem:[#allocation2 + $0xf8] sm:$0xff] 0.0
      $region40: #{fused_matmul_bn.1} parent=35 // pred_fallthru
        _
      %v345 = vld [vmem:[#allocation2] sm:$0xff]
      %v346 = vld [vmem:[#allocation2 + $0x8] sm:$0xff]
      %v347 = vld [vmem:[#allocation2 + $0x10] sm:$0xff]
      %v348 = vld [vmem:[#allocation2 + $0x18] sm:$0xff]
      %v349 = vld [vmem:[#allocation2 + $0x20] sm:$0xff]
      %v350 = vld [vmem:[#allocation2 + $0x28] sm:$0xff]
      %v351 = vld [vmem:[#allocation2 + $0x30] sm:$0xff]
      %v352 = vld [vmem:[#allocation2 + $0x38] sm:$0xff]
      %v353 = vld [vmem:[#allocation2 + $0x40] sm:$0xff]
      %v354 = vld [vmem:[#allocation2 + $0x48] sm:$0xff]
      %v355 = vld [vmem:[#allocation2 + $0x50] sm:$0xff]
      %v356 = vld [vmem:[#allocation2 + $0x58] sm:$0xff]
      %v357 = vld [vmem:[#allocation2 + $0x60] sm:$0xff]
      %v358 = vld [vmem:[#allocation2 + $0x68] sm:$0xff]
      %v359 = vld [vmem:[#allocation2 + $0x70] sm:$0xff]
      %v360 = vld [vmem:[#allocation2 + $0x78] sm:$0xff]
      %v361 = vld [vmem:[#allocation2 + $0x80] sm:$0xff]
      %v362 = vld [vmem:[#allocation2 + $0x88] sm:$0xff]
      %v363 = vld [vmem:[#allocation2 + $0x90] sm:$0xff]
      %v364 = vld [vmem:[#allocation2 + $0x98] sm:$0xff]
      %v365 = vld [vmem:[#allocation2 + $0xa0] sm:$0xff]
      %v366 = vld [vmem:[#allocation2 + $0xa8] sm:$0xff]
      %v367 = vld [vmem:[#allocation2 + $0xb0] sm:$0xff]
      %v368 = vld [vmem:[#allocation2 + $0xb8] sm:$0xff]
      %v369 = vld [vmem:[#allocation2 + $0xc0] sm:$0xff]
      %v370 = vld [vmem:[#allocation2 + $0xc8] sm:$0xff]
      %v371 = vld [vmem:[#allocation2 + $0xd0] sm:$0xff]
      %v372 = vld [vmem:[#allocation2 + $0xd8] sm:$0xff]
      %v373 = vld [vmem:[#allocation2 + $0xe0] sm:$0xff]
      %v374 = vld [vmem:[#allocation2 + $0xe8] sm:$0xff]
      %v375 = vld [vmem:[#allocation2 + $0xf0] sm:$0xff]
      %v376 = vld [vmem:[#allocation2 + $0xf8] sm:$0xff]
      %v377 = vld [vmem:[%s281] sm:$0xff]
      %v378 = vld [vmem:[%s281 + $0x8] sm:$0xff]
      %v379 = vld [vmem:[%s281 + $0x10] sm:$0xff]
      %v380 = vld [vmem:[%s281 + $0x18] sm:$0xff]
      %v381 = vld [vmem:[%s281 + $0x20] sm:$0xff]
      %v382 = vld [vmem:[%s281 + $0x28] sm:$0xff]
      %v383 = vld [vmem:[%s281 + $0x30] sm:$0xff]
      %v384 = vld [vmem:[%s281 + $0x38] sm:$0xff]
      %v385 = vld [vmem:[%s281 + $0x40] sm:$0xff]
      %v386 = vld [vmem:[%s281 + $0x48] sm:$0xff]
      %v387 = vld [vmem:[%s281 + $0x50] sm:$0xff]
      %v388 = vld [vmem:[%s281 + $0x58] sm:$0xff]
      %v389 = vld [vmem:[%s281 + $0x60] sm:$0xff]
      %v390 = vld [vmem:[%s281 + $0x68] sm:$0xff]
      %v391 = vld [vmem:[%s281 + $0x70] sm:$0xff]
      %v392 = vld [vmem:[%s281 + $0x78] sm:$0xff]
      %v393 = vld [vmem:[%s281 + $0x80] sm:$0xff]
      %v394 = vld [vmem:[%s281 + $0x88] sm:$0xff]
      %v395 = vld [vmem:[%s281 + $0x90] sm:$0xff]
      %v396 = vld [vmem:[%s281 + $0x98] sm:$0xff]
      %v397 = vld [vmem:[%s281 + $0xa0] sm:$0xff]
      %v398 = vld [vmem:[%s281 + $0xa8] sm:$0xff]
      %v399 = vld [vmem:[%s281 + $0xb0] sm:$0xff]
      %v400 = vld [vmem:[%s281 + $0xb8] sm:$0xff]
      %v401 = vld [vmem:[%s281 + $0xc0] sm:$0xff]
      %v402 = vld [vmem:[%s281 + $0xc8] sm:$0xff]
      %v403 = vld [vmem:[%s281 + $0xd0] sm:$0xff]
      %v404 = vld [vmem:[%s281 + $0xd8] sm:$0xff]
      %v405 = vld [vmem:[%s281 + $0xe0] sm:$0xff]
      %v406 = vld [vmem:[%s281 + $0xe8] sm:$0xff]
      %v407 = vld [vmem:[%s281 + $0xf0] sm:$0xff]
      %v408 = vld [vmem:[%s281 + $0xf8] sm:$0xff]
      %v409 = vld [vmem:[%s291] sm:$0xf]
      %v410 = vld [vmem:[%s291 + $0x4] sm:$0xf]
      %v411 = vld [vmem:[%s291 + $0x8] sm:$0xf]
      %v412 = vld [vmem:[%s291 + $0xc] sm:$0xf]
      %v413 = vld [vmem:[%s291 + $0x10] sm:$0xf]
      %v414 = vld [vmem:[%s291 + $0x14] sm:$0xf]
      %v415 = vld [vmem:[%s291 + $0x18] sm:$0xf]
      %v416 = vld [vmem:[%s291 + $0x1c] sm:$0xf]
      %v417 = vld [vmem:[%s291 + $0x20] sm:$0xf]
      %v418 = vld [vmem:[%s291 + $0x24] sm:$0xf]
      %v419 = vld [vmem:[%s291 + $0x28] sm:$0xf]
      %v420 = vld [vmem:[%s291 + $0x2c] sm:$0xf]
      %v421 = vld [vmem:[%s291 + $0x30] sm:$0xf]
      %v422 = vld [vmem:[%s291 + $0x34] sm:$0xf]
      %v423 = vld [vmem:[%s291 + $0x38] sm:$0xf]
      %v424 = vld [vmem:[%s291 + $0x3c] sm:$0xf]
      %v425 = vld [vmem:[%s291 + $0x40] sm:$0xf]
      %v426 = vld [vmem:[%s291 + $0x44] sm:$0xf]
      %v427 = vld [vmem:[%s291 + $0x48] sm:$0xf]
      %v428 = vld [vmem:[%s291 + $0x4c] sm:$0xf]
      %v429 = vld [vmem:[%s291 + $0x50] sm:$0xf]
      %v430 = vld [vmem:[%s291 + $0x54] sm:$0xf]
      %v431 = vld [vmem:[%s291 + $0x58] sm:$0xf]
      %v432 = vld [vmem:[%s291 + $0x5c] sm:$0xf]
      %v433 = vld [vmem:[%s291 + $0x60] sm:$0xf]
      %v434 = vld [vmem:[%s291 + $0x64] sm:$0xf]
      %v435 = vld [vmem:[%s291 + $0x68] sm:$0xf]
      %v436 = vld [vmem:[%s291 + $0x6c] sm:$0xf]
      %v437 = vld [vmem:[%s291 + $0x70] sm:$0xf]
      %v438 = vld [vmem:[%s291 + $0x74] sm:$0xf]
      %v439 = vld [vmem:[%s291 + $0x78] sm:$0xf]
      %v440 = vld [vmem:[%s291 + $0x7c] sm:$0xf]
      %v473 = vunpack.c.l.b16 %v377
      %v474 = vunpack.c.h.b16 %v377
      %v475 = vunpack.c.l.b16 %v378
      %v476 = vunpack.c.h.b16 %v378
      %v477 = vunpack.c.l.b16 %v379
      %v478 = vunpack.c.h.b16 %v379
      %v479 = vunpack.c.l.b16 %v380
      %v480 = vunpack.c.h.b16 %v380
      %v481 = vunpack.c.l.b16 %v381
      %v482 = vunpack.c.h.b16 %v381
      %v483 = vunpack.c.l.b16 %v382
      %v484 = vunpack.c.h.b16 %v382
      %v485 = vunpack.c.l.b16 %v383
      %v486 = vunpack.c.h.b16 %v383
      %v487 = vunpack.c.l.b16 %v384
      %v488 = vunpack.c.h.b16 %v384
      %v489 = vunpack.c.l.b16 %v385
      %v490 = vunpack.c.h.b16 %v385
      %v491 = vunpack.c.l.b16 %v386
      %v492 = vunpack.c.h.b16 %v386
      %v493 = vunpack.c.l.b16 %v387
      %v494 = vunpack.c.h.b16 %v387
      %v495 = vunpack.c.l.b16 %v388
      %v496 = vunpack.c.h.b16 %v388
      %v497 = vunpack.c.l.b16 %v389
      %v498 = vunpack.c.h.b16 %v389
      %v499 = vunpack.c.l.b16 %v390
      %v500 = vunpack.c.h.b16 %v390
      %v501 = vunpack.c.l.b16 %v391
      %v502 = vunpack.c.h.b16 %v391
      %v503 = vunpack.c.l.b16 %v392
      %v504 = vunpack.c.h.b16 %v392
      %v505 = vunpack.c.l.b16 %v393
      %v506 = vunpack.c.h.b16 %v393
      %v507 = vunpack.c.l.b16 %v394
      %v508 = vunpack.c.h.b16 %v394
      %v509 = vunpack.c.l.b16 %v395
      %v510 = vunpack.c.h.b16 %v395
      %v511 = vunpack.c.l.b16 %v396
      %v512 = vunpack.c.h.b16 %v396
      %v513 = vunpack.c.l.b16 %v397
      %v514 = vunpack.c.h.b16 %v397
      %v515 = vunpack.c.l.b16 %v398
      %v516 = vunpack.c.h.b16 %v398
      %v517 = vunpack.c.l.b16 %v399
      %v518 = vunpack.c.h.b16 %v399
      %v519 = vunpack.c.l.b16 %v400
      %v520 = vunpack.c.h.b16 %v400
      %v521 = vunpack.c.l.b16 %v401
      %v522 = vunpack.c.h.b16 %v401
      %v523 = vunpack.c.l.b16 %v402
      %v524 = vunpack.c.h.b16 %v402
      %v525 = vunpack.c.l.b16 %v403
      %v526 = vunpack.c.h.b16 %v403
      %v527 = vunpack.c.l.b16 %v404
      %v528 = vunpack.c.h.b16 %v404
      %v529 = vunpack.c.l.b16 %v405
      %v530 = vunpack.c.h.b16 %v405
      %v531 = vunpack.c.l.b16 %v406
      %v532 = vunpack.c.h.b16 %v406
      %v533 = vunpack.c.l.b16 %v407
      %v534 = vunpack.c.h.b16 %v407
      %v535 = vunpack.c.l.b16 %v408
      %v536 = vunpack.c.h.b16 %v408
      %v537 = vpack.c.b16 %v475, %v473
      %v538 = vpack.c.b16 %v476, %v474
      %v539 = vpack.c.b16 %v479, %v477
      %v540 = vpack.c.b16 %v480, %v478
      %v541 = vpack.c.b16 %v483, %v481
      %v542 = vpack.c.b16 %v484, %v482
      %v543 = vpack.c.b16 %v487, %v485
      %v544 = vpack.c.b16 %v488, %v486
      %v545 = vpack.c.b16 %v491, %v489
      %v546 = vpack.c.b16 %v492, %v490
      %v547 = vpack.c.b16 %v495, %v493
      %v548 = vpack.c.b16 %v496, %v494
      %v549 = vpack.c.b16 %v499, %v497
      %v550 = vpack.c.b16 %v500, %v498
      %v551 = vpack.c.b16 %v503, %v501
      %v552 = vpack.c.b16 %v504, %v502
      %v553 = vpack.c.b16 %v507, %v505
      %v554 = vpack.c.b16 %v508, %v506
      %v555 = vpack.c.b16 %v511, %v509
      %v556 = vpack.c.b16 %v512, %v510
      %v557 = vpack.c.b16 %v515, %v513
      %v558 = vpack.c.b16 %v516, %v514
      %v559 = vpack.c.b16 %v519, %v517
      %v560 = vpack.c.b16 %v520, %v518
      %v561 = vpack.c.b16 %v523, %v521
      %v562 = vpack.c.b16 %v524, %v522
      %v563 = vpack.c.b16 %v527, %v525
      %v564 = vpack.c.b16 %v528, %v526
      %v565 = vpack.c.b16 %v531, %v529
      %v566 = vpack.c.b16 %v532, %v530
      %v567 = vpack.c.b16 %v535, %v533
      %v568 = vpack.c.b16 %v536, %v534
      %v633 = vunpack.c.l.b16 %v409
      %v634 = vunpack.c.l.b16 %v410
      %v635 = vunpack.c.l.b16 %v411
      %v636 = vunpack.c.l.b16 %v412
      %v637 = vunpack.c.l.b16 %v413
      %v638 = vunpack.c.l.b16 %v414
      %v639 = vunpack.c.l.b16 %v415
      %v640 = vunpack.c.l.b16 %v416
      %v641 = vunpack.c.l.b16 %v417
      %v642 = vunpack.c.l.b16 %v418
      %v643 = vunpack.c.l.b16 %v419
      %v644 = vunpack.c.l.b16 %v420
      %v645 = vunpack.c.l.b16 %v421
      %v646 = vunpack.c.l.b16 %v422
      %v647 = vunpack.c.l.b16 %v423
      %v648 = vunpack.c.l.b16 %v424
      %v649 = vunpack.c.l.b16 %v425
      %v650 = vunpack.c.l.b16 %v426
      %v651 = vunpack.c.l.b16 %v427
      %v652 = vunpack.c.l.b16 %v428
      %v653 = vunpack.c.l.b16 %v429
      %v654 = vunpack.c.l.b16 %v430
      %v655 = vunpack.c.l.b16 %v431
      %v656 = vunpack.c.l.b16 %v432
      %v657 = vunpack.c.l.b16 %v433
      %v658 = vunpack.c.l.b16 %v434
      %v659 = vunpack.c.l.b16 %v435
      %v660 = vunpack.c.l.b16 %v436
      %v661 = vunpack.c.l.b16 %v437
      %v662 = vunpack.c.l.b16 %v438
      %v663 = vunpack.c.l.b16 %v439
      %v664 = vunpack.c.l.b16 %v440
      %v665 = vpack.c.b16 %v634, %v633
      %v666 = vpack.c.b16 %v636, %v635
      %v667 = vpack.c.b16 %v638, %v637
      %v668 = vpack.c.b16 %v640, %v639
      %v669 = vpack.c.b16 %v642, %v641
      %v670 = vpack.c.b16 %v644, %v643
      %v671 = vpack.c.b16 %v646, %v645
      %v672 = vpack.c.b16 %v648, %v647
      %v673 = vpack.c.b16 %v650, %v649
      %v674 = vpack.c.b16 %v652, %v651
      %v675 = vpack.c.b16 %v654, %v653
      %v676 = vpack.c.b16 %v656, %v655
      %v677 = vpack.c.b16 %v658, %v657
      %v678 = vpack.c.b16 %v660, %v659
      %v679 = vpack.c.b16 %v662, %v661
      %v680 = vpack.c.b16 %v664, %v663
      %697 = vmatprep.subr.bf16.mxu0 0
      %698 = vmatpush1.bf16.msra.mxu0 %v672
      %699 = vmatprep.subr.bf16.mxu0 0
      %700 = vmatpush1.bf16.msra.mxu0 %v671
      %701 = vmatprep.subr.bf16.mxu0 0
      %702 = vmatpush1.bf16.msra.mxu0 %v670
      %703 = vmatprep.subr.bf16.mxu0 0
      %704 = vmatpush1.bf16.msra.mxu0 %v669
      %705 = vmatprep.subr.bf16.mxu0 0
      %706 = vmatpush1.bf16.msra.mxu0 %v668
      %707 = vmatprep.subr.bf16.mxu0 0
      %708 = vmatpush1.bf16.msra.mxu0 %v667
      %709 = vmatprep.subr.bf16.mxu0 0
      %710 = vmatpush1.bf16.msra.mxu0 %v666
      %711 = vmatprep.subr.bf16.mxu0 0
      %712 = vmatpush1.bf16.msra.mxu0 %v665
      %713 = vmatprep.subr.bf16.mxu0 0
      %714 = vmatpush2.bf16.msra.mxu0 %v680
      %715 = vmatprep.subr.bf16.mxu0 0
      %716 = vmatpush2.bf16.msra.mxu0 %v679
      %717 = vmatprep.subr.bf16.mxu0 0
      %718 = vmatpush2.bf16.msra.mxu0 %v678
      %719 = vmatprep.subr.bf16.mxu0 0
      %720 = vmatpush2.bf16.msra.mxu0 %v677
      %721 = vmatprep.subr.bf16.mxu0 0
      %722 = vmatpush2.bf16.msra.mxu0 %v676
      %723 = vmatprep.subr.bf16.mxu0 0
      %724 = vmatpush2.bf16.msra.mxu0 %v675
      %725 = vmatprep.subr.bf16.mxu0 0
      %726 = vmatpush2.bf16.msra.mxu0 %v674
      %727 = vmatprep.subr.bf16.mxu0 0
      %728 = vmatpush2.bf16.msra.mxu0 %v673
      %729 = vmatprep.mubr.bf16.mxu0 %v538
      %730 = vmatmul.mubr.bf16.gmra.mxu0 %v537
      %v731 = vpop.f32.mrf.mxu0
      %v732 = vadd.f32 0.0, %v731
      %v733 = vpop.f32.mrf.mxu0
      %v734 = vpop.f32.mrf.mxu0
      %v735 = vadd.f32 0.0, %v734
      %v736 = vpop.f32.mrf.mxu0
      %737 = vmatprep.mubr.bf16.mxu0 %v540
      %738 = vmatmul.mubr.bf16.gmra.mxu0 %v539
      %v739 = vpop.f32.mrf.mxu0
      %v740 = vadd.f32 0.0, %v739
      %v741 = vpop.f32.mrf.mxu0
      %v742 = vpop.f32.mrf.mxu0
      %v743 = vadd.f32 0.0, %v742
      %v744 = vpop.f32.mrf.mxu0
      %745 = vmatprep.mubr.bf16.mxu0 %v542
      %746 = vmatmul.mubr.bf16.gmra.mxu0 %v541
      %v747 = vpop.f32.mrf.mxu0
      %v748 = vadd.f32 0.0, %v747
      %v749 = vpop.f32.mrf.mxu0
      %v750 = vpop.f32.mrf.mxu0
      %v751 = vadd.f32 0.0, %v750
      %v752 = vpop.f32.mrf.mxu0
      %753 = vmatprep.mubr.bf16.mxu0 %v544
      %754 = vmatmul.mubr.bf16.gmra.mxu0 %v543
      %v755 = vpop.f32.mrf.mxu0
      %v756 = vadd.f32 0.0, %v755
      %v757 = vpop.f32.mrf.mxu0
      %v758 = vpop.f32.mrf.mxu0
      %v759 = vadd.f32 0.0, %v758
      %v760 = vpop.f32.mrf.mxu0
      %761 = vmatprep.mubr.bf16.mxu0 %v546
      %762 = vmatmul.mubr.bf16.gmra.mxu0 %v545
      %v763 = vpop.f32.mrf.mxu0
      %v764 = vadd.f32 0.0, %v763
      %v765 = vpop.f32.mrf.mxu0
      %v766 = vpop.f32.mrf.mxu0
      %v767 = vadd.f32 0.0, %v766
      %v768 = vpop.f32.mrf.mxu0
      %769 = vmatprep.mubr.bf16.mxu0 %v548
      %770 = vmatmul.mubr.bf16.gmra.mxu0 %v547
      %v771 = vpop.f32.mrf.mxu0
      %v772 = vadd.f32 0.0, %v771
      %v773 = vpop.f32.mrf.mxu0
      %v774 = vpop.f32.mrf.mxu0
      %v775 = vadd.f32 0.0, %v774
      %v776 = vpop.f32.mrf.mxu0
      %777 = vmatprep.mubr.bf16.mxu0 %v550
      %778 = vmatmul.mubr.bf16.gmra.mxu0 %v549
      %v779 = vpop.f32.mrf.mxu0
      %v780 = vadd.f32 0.0, %v779
      %v781 = vpop.f32.mrf.mxu0
      %v782 = vpop.f32.mrf.mxu0
      %v783 = vadd.f32 0.0, %v782
      %v784 = vpop.f32.mrf.mxu0
      %785 = vmatprep.mubr.bf16.mxu0 %v552
      %786 = vmatmul.mubr.bf16.gmra.mxu0 %v551
      %v787 = vpop.f32.mrf.mxu0
      %v788 = vadd.f32 0.0, %v787
      %v789 = vpop.f32.mrf.mxu0
      %v790 = vpop.f32.mrf.mxu0
      %v791 = vadd.f32 0.0, %v790
      %v792 = vpop.f32.mrf.mxu0
      %793 = vmatprep.mubr.bf16.mxu0 %v554
      %794 = vmatmul.mubr.bf16.gmra.mxu0 %v553
      %v795 = vpop.f32.mrf.mxu0
      %v796 = vadd.f32 0.0, %v795
      %v797 = vpop.f32.mrf.mxu0
      %v798 = vpop.f32.mrf.mxu0
      %v799 = vadd.f32 0.0, %v798
      %v800 = vpop.f32.mrf.mxu0
      %801 = vmatprep.mubr.bf16.mxu0 %v556
      %802 = vmatmul.mubr.bf16.gmra.mxu0 %v555
      %v803 = vpop.f32.mrf.mxu0
      %v804 = vadd.f32 0.0, %v803
      %v805 = vpop.f32.mrf.mxu0
      %v806 = vpop.f32.mrf.mxu0
      %v807 = vadd.f32 0.0, %v806
      %v808 = vpop.f32.mrf.mxu0
      %809 = vmatprep.mubr.bf16.mxu0 %v558
      %810 = vmatmul.mubr.bf16.gmra.mxu0 %v557
      %v811 = vpop.f32.mrf.mxu0
      %v812 = vadd.f32 0.0, %v811
      %v813 = vpop.f32.mrf.mxu0
      %v814 = vpop.f32.mrf.mxu0
      %v815 = vadd.f32 0.0, %v814
      %v816 = vpop.f32.mrf.mxu0
      %817 = vmatprep.mubr.bf16.mxu0 %v560
      %818 = vmatmul.mubr.bf16.gmra.mxu0 %v559
      %v819 = vpop.f32.mrf.mxu0
      %v820 = vadd.f32 0.0, %v819
      %v821 = vpop.f32.mrf.mxu0
      %v822 = vpop.f32.mrf.mxu0
      %v823 = vadd.f32 0.0, %v822
      %v824 = vpop.f32.mrf.mxu0
      %825 = vmatprep.mubr.bf16.mxu0 %v562
      %826 = vmatmul.mubr.bf16.gmra.mxu0 %v561
      %v827 = vpop.f32.mrf.mxu0
      %v828 = vadd.f32 0.0, %v827
      %v829 = vpop.f32.mrf.mxu0
      %v830 = vpop.f32.mrf.mxu0
      %v831 = vadd.f32 0.0, %v830
      %v832 = vpop.f32.mrf.mxu0
      %833 = vmatprep.mubr.bf16.mxu0 %v564
      %834 = vmatmul.mubr.bf16.gmra.mxu0 %v563
      %v835 = vpop.f32.mrf.mxu0
      %v836 = vadd.f32 0.0, %v835
      %v837 = vpop.f32.mrf.mxu0
      %v838 = vpop.f32.mrf.mxu0
      %v839 = vadd.f32 0.0, %v838
      %v840 = vpop.f32.mrf.mxu0
      %841 = vmatprep.mubr.bf16.mxu0 %v566
      %842 = vmatmul.mubr.bf16.gmra.mxu0 %v565
      %v843 = vpop.f32.mrf.mxu0
      %v844 = vadd.f32 0.0, %v843
      %v845 = vpop.f32.mrf.mxu0
      %v846 = vpop.f32.mrf.mxu0
      %v847 = vadd.f32 0.0, %v846
      %v848 = vpop.f32.mrf.mxu0
      %849 = vmatprep.mubr.bf16.mxu0 %v568
      %850 = vmatmul.mubr.bf16.gmra.mxu0 %v567
      %v851 = vpop.f32.mrf.mxu0
      %v852 = vadd.f32 0.0, %v851
      %v853 = vpop.f32.mrf.mxu0
      %v854 = vpop.f32.mrf.mxu0
      %v855 = vadd.f32 0.0, %v854
      %v856 = vpop.f32.mrf.mxu0
      %857 = vdwg.mxu0
      %v858 = vadd.f32 %v345, %v732
      %v859 = vadd.f32 %v346, %v735
      %v860 = vadd.f32 %v347, %v740
      %v861 = vadd.f32 %v348, %v743
      %v862 = vadd.f32 %v349, %v748
      %v863 = vadd.f32 %v350, %v751
      %v864 = vadd.f32 %v351, %v756
      %v865 = vadd.f32 %v352, %v759
      %v866 = vadd.f32 %v353, %v764
      %v867 = vadd.f32 %v354, %v767
      %v868 = vadd.f32 %v355, %v772
      %v869 = vadd.f32 %v356, %v775
      %v870 = vadd.f32 %v357, %v780
      %v871 = vadd.f32 %v358, %v783
      %v872 = vadd.f32 %v359, %v788
      %v873 = vadd.f32 %v360, %v791
      %v874 = vadd.f32 %v361, %v796
      %v875 = vadd.f32 %v362, %v799
      %v876 = vadd.f32 %v363, %v804
      %v877 = vadd.f32 %v364, %v807
      %v878 = vadd.f32 %v365, %v812
      %v879 = vadd.f32 %v366, %v815
      %v880 = vadd.f32 %v367, %v820
      %v881 = vadd.f32 %v368, %v823
      %v882 = vadd.f32 %v369, %v828
      %v883 = vadd.f32 %v370, %v831
      %v884 = vadd.f32 %v371, %v836
      %v885 = vadd.f32 %v372, %v839
      %v886 = vadd.f32 %v373, %v844
      %v887 = vadd.f32 %v374, %v847
      %v888 = vadd.f32 %v375, %v852
      %v889 = vadd.f32 %v376, %v855
      %890 = vst [vmem:[#allocation2] sm:$0xff] %v858
      %891 = vst [vmem:[#allocation2 + $0x8] sm:$0xff] %v859
      %892 = vst [vmem:[#allocation2 + $0x10] sm:$0xff] %v860
      %893 = vst [vmem:[#allocation2 + $0x18] sm:$0xff] %v861
      %894 = vst [vmem:[#allocation2 + $0x20] sm:$0xff] %v862
      %895 = vst [vmem:[#allocation2 + $0x28] sm:$0xff] %v863
      %896 = vst [vmem:[#allocation2 + $0x30] sm:$0xff] %v864
      %897 = vst [vmem:[#allocation2 + $0x38] sm:$0xff] %v865
      %898 = vst [vmem:[#allocation2 + $0x40] sm:$0xff] %v866
      %899 = vst [vmem:[#allocation2 + $0x48] sm:$0xff] %v867
      %900 = vst [vmem:[#allocation2 + $0x50] sm:$0xff] %v868
      %901 = vst [vmem:[#allocation2 + $0x58] sm:$0xff] %v869
      %902 = vst [vmem:[#allocation2 + $0x60] sm:$0xff] %v870
      %903 = vst [vmem:[#allocation2 + $0x68] sm:$0xff] %v871
      %904 = vst [vmem:[#allocation2 + $0x70] sm:$0xff] %v872
      %905 = vst [vmem:[#allocation2 + $0x78] sm:$0xff] %v873
      %906 = vst [vmem:[#allocation2 + $0x80] sm:$0xff] %v874
      %907 = vst [vmem:[#allocation2 + $0x88] sm:$0xff] %v875
      %908 = vst [vmem:[#allocation2 + $0x90] sm:$0xff] %v876
      %909 = vst [vmem:[#allocation2 + $0x98] sm:$0xff] %v877
      %910 = vst [vmem:[#allocation2 + $0xa0] sm:$0xff] %v878
      %911 = vst [vmem:[#allocation2 + $0xa8] sm:$0xff] %v879
      %912 = vst [vmem:[#allocation2 + $0xb0] sm:$0xff] %v880
      %913 = vst [vmem:[#allocation2 + $0xb8] sm:$0xff] %v881
      %914 = vst [vmem:[#allocation2 + $0xc0] sm:$0xff] %v882
      %915 = vst [vmem:[#allocation2 + $0xc8] sm:$0xff] %v883
      %916 = vst [vmem:[#allocation2 + $0xd0] sm:$0xff] %v884
      %917 = vst [vmem:[#allocation2 + $0xd8] sm:$0xff] %v885
      %918 = vst [vmem:[#allocation2 + $0xe0] sm:$0xff] %v886
      %919 = vst [vmem:[#allocation2 + $0xe8] sm:$0xff] %v887
      %920 = vst [vmem:[#allocation2 + $0xf0] sm:$0xff] %v888
      %921 = vst [vmem:[#allocation2 + $0xf8] sm:$0xff] %v889
      // Predicated region
      $region41: #{fused_matmul_bn.1} parent=35 // pred_check
        %p922 = pneg %p309
      $region42: #{fused_matmul_bn.1} parent=35 // pred_check_branch
        %924 = sbr.rel (%p922) target = $region44
      $region43: #{fused_matmul_bn.1} parent=35 // pred_region
        %v925 = vld [vmem:[#allocation2] sm:$0xff]
        %v926 = vld [vmem:[#allocation2 + $0x8] sm:$0xff]
        %v927 = vld [vmem:[#allocation2 + $0x10] sm:$0xff]
        %v928 = vld [vmem:[#allocation2 + $0x18] sm:$0xff]
        %v929 = vld [vmem:[#allocation2 + $0x20] sm:$0xff]
        %v930 = vld [vmem:[#allocation2 + $0x28] sm:$0xff]
        %v931 = vld [vmem:[#allocation2 + $0x30] sm:$0xff]
        %v932 = vld [vmem:[#allocation2 + $0x38] sm:$0xff]
        %v933 = vld [vmem:[#allocation2 + $0x40] sm:$0xff]
        %v934 = vld [vmem:[#allocation2 + $0x48] sm:$0xff]
        %v935 = vld [vmem:[#allocation2 + $0x50] sm:$0xff]
        %v936 = vld [vmem:[#allocation2 + $0x58] sm:$0xff]
        %v937 = vld [vmem:[#allocation2 + $0x60] sm:$0xff]
        %v938 = vld [vmem:[#allocation2 + $0x68] sm:$0xff]
        %v939 = vld [vmem:[#allocation2 + $0x70] sm:$0xff]
        %v940 = vld [vmem:[#allocation2 + $0x78] sm:$0xff]
        %v941 = vld [vmem:[#allocation2 + $0x80] sm:$0xff]
        %v942 = vld [vmem:[#allocation2 + $0x88] sm:$0xff]
        %v943 = vld [vmem:[#allocation2 + $0x90] sm:$0xff]
        %v944 = vld [vmem:[#allocation2 + $0x98] sm:$0xff]
        %v945 = vld [vmem:[#allocation2 + $0xa0] sm:$0xff]
        %v946 = vld [vmem:[#allocation2 + $0xa8] sm:$0xff]
        %v947 = vld [vmem:[#allocation2 + $0xb0] sm:$0xff]
        %v948 = vld [vmem:[#allocation2 + $0xb8] sm:$0xff]
        %v949 = vld [vmem:[#allocation2 + $0xc0] sm:$0xff]
        %v950 = vld [vmem:[#allocation2 + $0xc8] sm:$0xff]
        %v951 = vld [vmem:[#allocation2 + $0xd0] sm:$0xff]
        %v952 = vld [vmem:[#allocation2 + $0xd8] sm:$0xff]
        %v953 = vld [vmem:[#allocation2 + $0xe0] sm:$0xff]
        %v954 = vld [vmem:[#allocation2 + $0xe8] sm:$0xff]
        %v955 = vld [vmem:[#allocation2 + $0xf0] sm:$0xff]
        %v956 = vld [vmem:[#allocation2 + $0xf8] sm:$0xff]
        %v957 = vld [vmem:[%s295] sm:$0x1]
        %v959 = vlaneseq
        %v960 = vshrl.u32 %v959, 7
        %v961 = vsub.s32 0, %v960
        %v962 = vrot.slane %v957, %v961
        %v964 = vmul.f32 %v925, %v962
        %v965 = vmul.f32 %v926, %v962
        %v966 = vmul.f32 %v927, %v962
        %v967 = vmul.f32 %v928, %v962
        %v968 = vmul.f32 %v929, %v962
        %v969 = vmul.f32 %v930, %v962
        %v970 = vmul.f32 %v931, %v962
        %v971 = vmul.f32 %v932, %v962
        %v972 = vmul.f32 %v933, %v962
        %v973 = vmul.f32 %v934, %v962
        %v974 = vmul.f32 %v935, %v962
        %v975 = vmul.f32 %v936, %v962
        %v976 = vmul.f32 %v937, %v962
        %v977 = vmul.f32 %v938, %v962
        %v978 = vmul.f32 %v939, %v962
        %v979 = vmul.f32 %v940, %v962
        %v980 = vmul.f32 %v941, %v962
        %v981 = vmul.f32 %v942, %v962
        %v982 = vmul.f32 %v943, %v962
        %v983 = vmul.f32 %v944, %v962
        %v984 = vmul.f32 %v945, %v962
        %v985 = vmul.f32 %v946, %v962
        %v986 = vmul.f32 %v947, %v962
        %v987 = vmul.f32 %v948, %v962
        %v988 = vmul.f32 %v949, %v962
        %v989 = vmul.f32 %v950, %v962
        %v990 = vmul.f32 %v951, %v962
        %v991 = vmul.f32 %v952, %v962
        %v992 = vmul.f32 %v953, %v962
        %v993 = vmul.f32 %v954, %v962
        %v994 = vmul.f32 %v955, %v962
        %v995 = vmul.f32 %v956, %v962
        %v996 = vld [vmem:[%s298] sm:$0x1]
        %v998 = vlaneseq
        %v999 = vshrl.u32 %v998, 7
        %v1000 = vsub.s32 0, %v999
        %v1001 = vrot.slane %v996, %v1000
        %v1003 = vadd.f32 %v964, %v1001
        %v1004 = vadd.f32 %v965, %v1001
        %v1005 = vadd.f32 %v966, %v1001
        %v1006 = vadd.f32 %v967, %v1001
        %v1007 = vadd.f32 %v968, %v1001
        %v1008 = vadd.f32 %v969, %v1001
        %v1009 = vadd.f32 %v970, %v1001
        %v1010 = vadd.f32 %v971, %v1001
        %v1011 = vadd.f32 %v972, %v1001
        %v1012 = vadd.f32 %v973, %v1001
        %v1013 = vadd.f32 %v974, %v1001
        %v1014 = vadd.f32 %v975, %v1001
        %v1015 = vadd.f32 %v976, %v1001
        %v1016 = vadd.f32 %v977, %v1001
        %v1017 = vadd.f32 %v978, %v1001
        %v1018 = vadd.f32 %v979, %v1001
        %v1019 = vadd.f32 %v980, %v1001
        %v1020 = vadd.f32 %v981, %v1001
        %v1021 = vadd.f32 %v982, %v1001
        %v1022 = vadd.f32 %v983, %v1001
        %v1023 = vadd.f32 %v984, %v1001
        %v1024 = vadd.f32 %v985, %v1001
        %v1025 = vadd.f32 %v986, %v1001
        %v1026 = vadd.f32 %v987, %v1001
        %v1027 = vadd.f32 %v988, %v1001
        %v1028 = vadd.f32 %v989, %v1001
        %v1029 = vadd.f32 %v990, %v1001
        %v1030 = vadd.f32 %v991, %v1001
        %v1031 = vadd.f32 %v992, %v1001
        %v1032 = vadd.f32 %v993, %v1001
        %v1033 = vadd.f32 %v994, %v1001
        %v1034 = vadd.f32 %v995, %v1001
        %v1035 = vmax.f32 %v1003, 0.0
        %v1036 = vmax.f32 %v1004, 0.0
        %v1037 = vmax.f32 %v1005, 0.0
        %v1038 = vmax.f32 %v1006, 0.0
        %v1039 = vmax.f32 %v1007, 0.0
        %v1040 = vmax.f32 %v1008, 0.0
        %v1041 = vmax.f32 %v1009, 0.0
        %v1042 = vmax.f32 %v1010, 0.0
        %v1043 = vmax.f32 %v1011, 0.0
        %v1044 = vmax.f32 %v1012, 0.0
        %v1045 = vmax.f32 %v1013, 0.0
        %v1046 = vmax.f32 %v1014, 0.0
        %v1047 = vmax.f32 %v1015, 0.0
        %v1048 = vmax.f32 %v1016, 0.0
        %v1049 = vmax.f32 %v1017, 0.0
        %v1050 = vmax.f32 %v1018, 0.0
        %v1051 = vmax.f32 %v1019, 0.0
        %v1052 = vmax.f32 %v1020, 0.0
        %v1053 = vmax.f32 %v1021, 0.0
        %v1054 = vmax.f32 %v1022, 0.0
        %v1055 = vmax.f32 %v1023, 0.0
        %v1056 = vmax.f32 %v1024, 0.0
        %v1057 = vmax.f32 %v1025, 0.0
        %v1058 = vmax.f32 %v1026, 0.0
        %v1059 = vmax.f32 %v1027, 0.0
        %v1060 = vmax.f32 %v1028, 0.0
        %v1061 = vmax.f32 %v1029, 0.0
        %v1062 = vmax.f32 %v1030, 0.0
        %v1063 = vmax.f32 %v1031, 0.0
        %v1064 = vmax.f32 %v1032, 0.0
        %v1065 = vmax.f32 %v1033, 0.0
        %v1066 = vmax.f32 %v1034, 0.0
        %v1067 = vpack.c.bf16 %v1036, %v1035
        %v1068 = vpack.c.bf16 %v1038, %v1037
        %v1069 = vpack.c.bf16 %v1040, %v1039
        %v1070 = vpack.c.bf16 %v1042, %v1041
        %v1071 = vpack.c.bf16 %v1044, %v1043
        %v1072 = vpack.c.bf16 %v1046, %v1045
        %v1073 = vpack.c.bf16 %v1048, %v1047
        %v1074 = vpack.c.bf16 %v1050, %v1049
        %v1075 = vpack.c.bf16 %v1052, %v1051
        %v1076 = vpack.c.bf16 %v1054, %v1053
        %v1077 = vpack.c.bf16 %v1056, %v1055
        %v1078 = vpack.c.bf16 %v1058, %v1057
        %v1079 = vpack.c.bf16 %v1060, %v1059
        %v1080 = vpack.c.bf16 %v1062, %v1061
        %v1081 = vpack.c.bf16 %v1064, %v1063
        %v1082 = vpack.c.bf16 %v1066, %v1065
        %v1099 = vunpack.c.l.b16 %v1067
        %v1100 = vunpack.c.h.b16 %v1067
        %v1101 = vunpack.c.l.b16 %v1068
        %v1102 = vunpack.c.h.b16 %v1068
        %v1103 = vunpack.c.l.b16 %v1069
        %v1104 = vunpack.c.h.b16 %v1069
        %v1105 = vunpack.c.l.b16 %v1070
        %v1106 = vunpack.c.h.b16 %v1070
        %v1107 = vunpack.c.l.b16 %v1071
        %v1108 = vunpack.c.h.b16 %v1071
        %v1109 = vunpack.c.l.b16 %v1072
        %v1110 = vunpack.c.h.b16 %v1072
        %v1111 = vunpack.c.l.b16 %v1073
        %v1112 = vunpack.c.h.b16 %v1073
        %v1113 = vunpack.c.l.b16 %v1074
        %v1114 = vunpack.c.h.b16 %v1074
        %v1115 = vunpack.c.l.b16 %v1075
        %v1116 = vunpack.c.h.b16 %v1075
        %v1117 = vunpack.c.l.b16 %v1076
        %v1118 = vunpack.c.h.b16 %v1076
        %v1119 = vunpack.c.l.b16 %v1077
        %v1120 = vunpack.c.h.b16 %v1077
        %v1121 = vunpack.c.l.b16 %v1078
        %v1122 = vunpack.c.h.b16 %v1078
        %v1123 = vunpack.c.l.b16 %v1079
        %v1124 = vunpack.c.h.b16 %v1079
        %v1125 = vunpack.c.l.b16 %v1080
        %v1126 = vunpack.c.h.b16 %v1080
        %v1127 = vunpack.c.l.b16 %v1081
        %v1128 = vunpack.c.h.b16 %v1081
        %v1129 = vunpack.c.l.b16 %v1082
        %v1130 = vunpack.c.h.b16 %v1082
        %v1131 = vpack.c.b16 %v1099, %v1099
        %v1132 = vpack.c.b16 %v1100, %v1100
        %v1133 = vpack.c.b16 %v1101, %v1101
        %v1134 = vpack.c.b16 %v1102, %v1102
        %v1135 = vpack.c.b16 %v1103, %v1103
        %v1136 = vpack.c.b16 %v1104, %v1104
        %v1137 = vpack.c.b16 %v1105, %v1105
        %v1138 = vpack.c.b16 %v1106, %v1106
        %v1139 = vpack.c.b16 %v1107, %v1107
        %v1140 = vpack.c.b16 %v1108, %v1108
        %v1141 = vpack.c.b16 %v1109, %v1109
        %v1142 = vpack.c.b16 %v1110, %v1110
        %v1143 = vpack.c.b16 %v1111, %v1111
        %v1144 = vpack.c.b16 %v1112, %v1112
        %v1145 = vpack.c.b16 %v1113, %v1113
        %v1146 = vpack.c.b16 %v1114, %v1114
        %v1147 = vpack.c.b16 %v1115, %v1115
        %v1148 = vpack.c.b16 %v1116, %v1116
        %v1149 = vpack.c.b16 %v1117, %v1117
        %v1150 = vpack.c.b16 %v1118, %v1118
        %v1151 = vpack.c.b16 %v1119, %v1119
        %v1152 = vpack.c.b16 %v1120, %v1120
        %v1153 = vpack.c.b16 %v1121, %v1121
        %v1154 = vpack.c.b16 %v1122, %v1122
        %v1155 = vpack.c.b16 %v1123, %v1123
        %v1156 = vpack.c.b16 %v1124, %v1124
        %v1157 = vpack.c.b16 %v1125, %v1125
        %v1158 = vpack.c.b16 %v1126, %v1126
        %v1159 = vpack.c.b16 %v1127, %v1127
        %v1160 = vpack.c.b16 %v1128, %v1128
        %v1161 = vpack.c.b16 %v1129, %v1129
        %v1162 = vpack.c.b16 %v1130, %v1130
        %1195 = vst [vmem:[%s306] sm:$0xf] %v1131
        %1196 = vst [vmem:[%s306 + $0x4] sm:$0xf] %v1132
        %1197 = vst [vmem:[%s306 + $0x8] sm:$0xf] %v1133
        %1198 = vst [vmem:[%s306 + $0xc] sm:$0xf] %v1134
        %1199 = vst [vmem:[%s306 + $0x10] sm:$0xf] %v1135
        %1200 = vst [vmem:[%s306 + $0x14] sm:$0xf] %v1136
        %1201 = vst [vmem:[%s306 + $0x18] sm:$0xf] %v1137
        %1202 = vst [vmem:[%s306 + $0x1c] sm:$0xf] %v1138
        %1203 = vst [vmem:[%s306 + $0x20] sm:$0xf] %v1139
        %1204 = vst [vmem:[%s306 + $0x24] sm:$0xf] %v1140
        %1205 = vst [vmem:[%s306 + $0x28] sm:$0xf] %v1141
        %1206 = vst [vmem:[%s306 + $0x2c] sm:$0xf] %v1142
        %1207 = vst [vmem:[%s306 + $0x30] sm:$0xf] %v1143
        %1208 = vst [vmem:[%s306 + $0x34] sm:$0xf] %v1144
        %1209 = vst [vmem:[%s306 + $0x38] sm:$0xf] %v1145
        %1210 = vst [vmem:[%s306 + $0x3c] sm:$0xf] %v1146
        %1211 = vst [vmem:[%s306 + $0x40] sm:$0xf] %v1147
        %1212 = vst [vmem:[%s306 + $0x44] sm:$0xf] %v1148
        %1213 = vst [vmem:[%s306 + $0x48] sm:$0xf] %v1149
        %1214 = vst [vmem:[%s306 + $0x4c] sm:$0xf] %v1150
        %1215 = vst [vmem:[%s306 + $0x50] sm:$0xf] %v1151
        %1216 = vst [vmem:[%s306 + $0x54] sm:$0xf] %v1152
        %1217 = vst [vmem:[%s306 + $0x58] sm:$0xf] %v1153
        %1218 = vst [vmem:[%s306 + $0x5c] sm:$0xf] %v1154
        %1219 = vst [vmem:[%s306 + $0x60] sm:$0xf] %v1155
        %1220 = vst [vmem:[%s306 + $0x64] sm:$0xf] %v1156
        %1221 = vst [vmem:[%s306 + $0x68] sm:$0xf] %v1157
        %1222 = vst [vmem:[%s306 + $0x6c] sm:$0xf] %v1158
        %1223 = vst [vmem:[%s306 + $0x70] sm:$0xf] %v1159
        %1224 = vst [vmem:[%s306 + $0x74] sm:$0xf] %v1160
        %1225 = vst [vmem:[%s306 + $0x78] sm:$0xf] %v1161
        %1226 = vst [vmem:[%s306 + $0x7c] sm:$0xf] %v1162
      $region44: #{fused_matmul_bn.1} parent=35 // pred_fallthru
        _
      %s1227 = smul.u32 32, %s20
      %p1228 = scmp.lt.s32.totalorder %s1227, 255
      %s1229 = scalar_select %p1228, %s1227, 255
      %p1230 = scmp.lt.s32.totalorder %s21, 0
      %s1231 = scalar_select %p1230, %s21, 0
      %s1232 = sadd.s32 %s1231, %s1229
      %s1233 = smul.addr %s1232, 4
      %s1234 = scalar_lea.vmem %s4, %s1233
      // Predicated region
      $region45: #{fused_matmul_bn.1} parent=35 // pred_check
        %p1235 = pneg %p162
      $region46: #{fused_matmul_bn.1} parent=35 // pred_check_branch
        %1237 = sbr.rel (%p1235) target = $region48
      $region47: #{fused_matmul_bn.1} parent=35 // pred_region
        %s1238 = smul.u32 32, %s20
      $region48: #{fused_matmul_bn.1} parent=35 // pred_fallthru
        _
    $region36: #{fused_matmul_bn.1} parent=5 // pred_fallthru
      _
    %p1239 = scmp.le.s32.totalorder 2, %s10
    // Predicated region
    $region49: #{fused_matmul_bn.1} parent=5 // pred_check
      %p1240 = pneg %p1239
    $region50: #{fused_matmul_bn.1} parent=5 // pred_check_branch
      %1242 = sbr.rel (%p1240) target = $region52
    $region51: #{fused_matmul_bn.1} parent=5 // pred_region
      %s1243 = ssub.s32 %s10, 2
      // Predicated region
      $region53: #{fused_matmul_bn.1} parent=51 // pred_check
        %p1244 = pneg %p168
      $region54: #{fused_matmul_bn.1} parent=51 // pred_check_branch
        %1246 = sbr.rel (%p1244) target = $region56
      $region55: #{fused_matmul_bn.1} parent=51 // pred_region
        %s1247 = smul.u32 32, %s23
        %p1248 = scmp.lt.s32.totalorder %s1247, 255
        %s1249 = scalar_select %p1248, %s1247, 255
        %p1250 = scmp.lt.s32.totalorder %s24, 0
        %s1251 = scalar_select %p1250, %s24, 0
        %s1252 = sadd.s32 %s1251, %s1249
        %s1253 = smul.addr %s1252, 4
        %s1254 = scalar_lea.vmem %s4, %s1253
      $region56: #{fused_matmul_bn.1} parent=51 // pred_fallthru
        _
    $region52: #{fused_matmul_bn.1} parent=5 // pred_fallthru
      _
  $region6: #{fused_matmul_bn.1} parent=0 // loop_footer
    %s14 = sadd.s32 1, %s10
  $region7: #{fused_matmul_bn.1} parent=0 // loop_footer_branch
    %9 = sbr.rel target = $region3
  $region8: #{fused_matmul_bn.1} parent=0 // loop_exit
    _

</llo_original>
